<compile_context>
chip_gen: v5e
topology: v5e:2x2
jax: 0.10.0
libtpu: 0.0.40
codegen_flags: <defaults>
</compile_context>

<pallas_src>
import functools

import jax
import jax.numpy as jnp
import numpy as np
from jax.experimental import pallas as pl
from jax.experimental.pallas import tpu as pltpu


def _round_up(x, m):
    return ((x + m - 1) // m) * m


# ----------------------------------------------------------------------------
# Kernel: both towers in one body, no grid.
# ----------------------------------------------------------------------------
def _deepconn_fused_kernel(u_ref, i_ref, p_ref, ou_ref, oi_ref, *,
                           K, F, D, cb_off, fw_off, fb_off):
    """conv(K)+bias -> ReLU -> max over time -> linear+bias, user+item fused."""
    S = u_ref.shape[1]
    L = S - K + 1                                 # valid conv output length
    F2 = 2 * F

    p = p_ref[...]                                # (2F, P), tiny
    conv_w = p[:, 0:K]                            # (2F, K)
    conv_b = p[:, cb_off:cb_off + 1]              # (2F, 1)
    fc_w = p[:, fw_off:fw_off + D]                # (2F, D)  (= linear.weight.T)
    fc_b = p[:, fb_off:fb_off + D]                # (2F, D)  (bias replicated/row)

    # One (2F, S) slab: rows 0..F-1 = user doc, rows F..2F-1 = item doc.
    doc = jnp.concatenate(
        [jnp.broadcast_to(u_ref[...], (F, S)),
         jnp.broadcast_to(i_ref[...], (F, S))], axis=0)            # (2F, S)

    # 1-D valid conv via K static lane slices (no wrap, no tail mask needed).
    acc = conv_w[:, 0:1] * doc[:, 0:L]
    for dk in range(1, K):
        acc = acc + conv_w[:, dk:dk + 1] * doc[:, dk:dk + L]
    acc = acc + conv_b                                             # conv bias
    fea = jnp.maximum(acc, 0.0)                                    # ReLU

    # Global max-pool over time.
    pooled = jnp.max(fea, axis=1, keepdims=True)                   # (2F, 1)

    # Linear via VPU multiply + sublane reduce, split per tower (F-row groups).
    prod = pooled * fc_w                                           # (2F, D)
    out_u = jnp.sum(prod[0:F], axis=0, keepdims=True) + fc_b[0:1]        # (1, D)
    out_i = jnp.sum(prod[F:F2], axis=0, keepdims=True) + fc_b[F:F + 1]   # (1, D)

    # TODO(synk): Dropout(p=0.5) is treated as identity (eval-mode semantics);
    # training-mode Bernoulli masking/scaling is not implemented here.
    ou_ref[...] = out_u.reshape(ou_ref.shape)                      # (1, 1, D)
    oi_ref[...] = out_i.reshape(oi_ref.shape)                      # (1, 1, D)


@functools.partial(jax.jit,
                   static_argnames=("kernel_size", "filters_num", "fc_dim"))
def _deepconn_towers(user_doc, item_doc, packed_params, *,
                     kernel_size, filters_num, fc_dim):
    """user_doc/item_doc: (1, S) f32; packed_params: (2F, P) f32."""
    S = user_doc.shape[1]
    F, K, D = filters_num, kernel_size, fc_dim
    L = S - K + 1

    cb_off = _round_up(K, 8)
    fw_off = _round_up(cb_off + 1, 8)
    fb_off = _round_up(fw_off + D, 8)

    flops = 2 * (2 * F) * K * L + 2 * (2 * F) * D
    bytes_accessed = 4 * (2 * S + packed_params.size + 2 * D)

    kernel = functools.partial(
        _deepconn_fused_kernel,
        K=K, F=F, D=D, cb_off=cb_off, fw_off=fw_off, fb_off=fb_off)

    vmem = pl.BlockSpec(memory_space=pltpu.MemorySpace.VMEM)
    return pl.pallas_call(
        kernel,
        out_shape=(jax.ShapeDtypeStruct((1, 1, D), jnp.float32),
                   jax.ShapeDtypeStruct((1, 1, D), jnp.float32)),
        in_specs=[vmem, vmem, vmem],
        out_specs=(vmem, vmem),
        cost_estimate=pl.CostEstimate(
            flops=flops, transcendentals=0, bytes_accessed=bytes_accessed),
    )(user_doc, item_doc, packed_params)


# ----------------------------------------------------------------------------
# Parameter construction (deterministic, mirrors reset_para()) and packing.
# ----------------------------------------------------------------------------
def init_deepconn_params(key, cfg):
    F = cfg["filters_num"]
    K = cfg["kernel_size"]
    W = cfg["word_dim"]
    D = cfg["fc_dim"]
    k1, k2, k3, k4 = jax.random.split(key, 4)

    def xavier_normal(k, shape):  # Conv2d weight (out_c, in_c, kh, kw)
        fan_in = shape[1] * shape[2] * shape[3]
        fan_out = shape[0] * shape[2] * shape[3]
        std = (2.0 / (fan_in + fan_out)) ** 0.5
        return std * jax.random.normal(k, shape, jnp.float32)

    return {
        "conv_u_w": xavier_normal(k1, (F, 1, K, W)),
        "conv_i_w": xavier_normal(k2, (F, 1, K, W)),
        "conv_u_b": jnp.full((F,), 0.1, jnp.float32),
        "conv_i_b": jnp.full((F,), 0.1, jnp.float32),
        "u_lin_w": jax.random.uniform(k3, (D, F), jnp.float32, -0.1, 0.1),
        "i_lin_w": jax.random.uniform(k4, (D, F), jnp.float32, -0.1, 0.1),
        "u_lin_b": jnp.full((D,), 0.1, jnp.float32),
        "i_lin_b": jnp.full((D,), 0.1, jnp.float32),
    }


def pack_deepconn_params(params, cfg):
    """One-time prep: pack both towers into a single (2F, P) lane-aligned block.

    Lane layout per row: conv_w at lanes [0, K), conv_b at lane cb_off (8-aligned),
    fc_w (= linear.weight.T) at lanes [fw_off, fw_off+D), fc_b replicated per row
    at lanes [fb_off, fb_off+D).  Rows 0..F-1 = user tower, F..2F-1 = item tower.
    """
    F = cfg["filters_num"]
    K = cfg["kernel_size"]
    D = cfg["fc_dim"]
    if cfg["word_dim"] != 1:
        # TODO(synk): word_dim > 1 is shape-inconsistent in the original
        # PyTorch forward (unsqueeze pattern); only word_dim == 1 is supported.
        raise ValueError("DeepCoNN forward as written only supports word_dim == 1")

    cb_off = _round_up(K, 8)
    fw_off = _round_up(cb_off + 1, 8)
    fb_off = _round_up(fw_off + D, 8)
    P = fb_off + D

    def pack_one(conv_w, conv_b, lin_w, lin_b):
        blk = np.zeros((F, P), np.float32)
        blk[:, :K] = np.asarray(conv_w)[:, 0, :, 0]       # (F, K)
        blk[:, cb_off] = np.asarray(conv_b)               # (F,)
        blk[:, fw_off:fw_off + D] = np.asarray(lin_w).T   # (F, D)
        blk[:, fb_off:fb_off + D] = np.asarray(lin_b)[None, :]
        return blk

    packed = np.concatenate(
        [pack_one(params["conv_u_w"], params["conv_u_b"],
                  params["u_lin_w"], params["u_lin_b"]),
         pack_one(params["conv_i_w"], params["conv_i_b"],
                  params["i_lin_w"], params["i_lin_b"])], axis=0)  # (2F, P)
    return jnp.asarray(packed)


# ----------------------------------------------------------------------------
# Forward (mirrors DeepCoNN.forward; uids/iids carried but unused, as in torch).
# ----------------------------------------------------------------------------
def deepconn_forward(packed_params, cfg, datas):
    uids, iids, user_doc, item_doc = datas

    # Magic-768 transpose reproduced from the PyTorch forward for parity
    # (Python-level shape check; adds no ops when it does not trigger).
    if user_doc.shape[0] == 768:
        user_doc = user_doc.T
    if item_doc.shape[0] == 768:
        item_doc = item_doc.T

    if (user_doc.ndim != 2 or user_doc.shape[0] != 1
            or user_doc.shape != item_doc.shape):
        raise ValueError("documents must be (1, S) rows (word_dim == 1 case)")
    if user_doc.shape[1] < cfg["kernel_size"]:
        raise ValueError("document length must be >= kernel_size")
    if user_doc.dtype != jnp.float32:
        user_doc = user_doc.astype(jnp.float32)
    if item_doc.dtype != jnp.float32:
        item_doc = item_doc.astype(jnp.float32)

    # torch returns (stack([u_fea], 1), stack([i_fea], 1)) -> two (1,1,fc_dim).
    return _deepconn_towers(
        user_doc, item_doc, packed_params,
        kernel_size=cfg["kernel_size"],
        filters_num=cfg["filters_num"],
        fc_dim=cfg["fc_dim"])


# ----------------------------------------------------------------------------
# Pure-JAX reference (for correctness check) of one tower.
# ----------------------------------------------------------------------------
def _ref_branch(doc, conv_w_fk, conv_b_f, lin_w_df, lin_b_d):
    if doc.shape[0] == 768:
        doc = doc.T
    S = doc.shape[1]
    F, K = conv_w_fk.shape
    L = S - K + 1
    cols = jnp.stack([doc[0, dk:dk + L] for dk in range(K)], axis=0)  # (K, L)
    conv = conv_w_fk @ cols + conv_b_f[:, None]                       # (F, L)
    fea = jnp.maximum(conv, 0.0)
    pooled = fea.max(axis=1)                                          # (F,)
    out = lin_w_df @ pooled + lin_b_d                                 # (fc_dim,)
    return out[None, :]


if __name__ == "__main__":
    cfg = {"filters_num": 8, "kernel_size": 3, "word_dim": 1, "fc_dim": 16}
    S = 256  # lane-aligned stand-in for the 768-token docs

    key = jax.random.PRNGKey(0)
    kp, kd_u, kd_i = jax.random.split(key, 3)
    params = init_deepconn_params(kp, cfg)
    packed_params = pack_deepconn_params(params, cfg)

    uids = jnp.arange(1, dtype=jnp.int32)
    iids = jnp.arange(1, dtype=jnp.int32)
    user_doc = jax.random.normal(kd_u, (1, S), jnp.float32)
    item_doc = jax.random.normal(kd_i, (1, S), jnp.float32)

    u_out, i_out = deepconn_forward(packed_params, cfg,
                                    (uids, iids, user_doc, item_doc))
    jax.block_until_ready((u_out, i_out))

    # Correctness check against a pure-JAX reference.
    u_ref = _ref_branch(user_doc, params["conv_u_w"][:, 0, :, 0],
                        params["conv_u_b"], params["u_lin_w"], params["u_lin_b"])
    i_ref = _ref_branch(item_doc, params["conv_i_w"][:, 0, :, 0],
                        params["conv_i_b"], params["i_lin_w"], params["i_lin_b"])

    assert u_out.shape == (1, 1, cfg["fc_dim"])
    assert i_out.shape == (1, 1, cfg["fc_dim"])
    np.testing.assert_allclose(np.asarray(u_out[:, 0, :]), np.asarray(u_ref),
                               rtol=1e-5, atol=1e-5)
    np.testing.assert_allclose(np.asarray(i_out[:, 0, :]), np.asarray(i_ref),
                               rtol=1e-5, atol=1e-5)
    print("KERNEL_OK")
</pallas_src>

<mosaic_0001>
module attributes {stable_mosaic.version = 11 : i64} {
  func.func @_deepconn_fused_kernel(%arg0: memref<1x256xf32, #tpu.memory_space<vmem>>, %arg1: memref<1x256xf32, #tpu.memory_space<vmem>>, %arg2: memref<16x48xf32, #tpu.memory_space<vmem>>, %arg3: memref<1x1x16xf32, #tpu.memory_space<vmem>>, %arg4: memref<1x1x16xf32, #tpu.memory_space<vmem>>) attributes {dimension_semantics = [], scalar_prefetch = 0 : i64, scratch_operands = 0 : i64, tpu.core_type = #tpu.core_type<tc>} {
    %c0 = arith.constant 0 : index
    %c0_0 = arith.constant 0 : index
    %0 = vector.load %arg2[%c0, %c0_0] : memref<16x48xf32, #tpu.memory_space<vmem>>, vector<16x48xf32>
    %1 = vector.extract_strided_slice %0 {offsets = [0, 0], sizes = [16, 3], strides = [1, 1]} : vector<16x48xf32> to vector<16x3xf32>
    %2 = vector.extract_strided_slice %0 {offsets = [0, 8], sizes = [16, 1], strides = [1, 1]} : vector<16x48xf32> to vector<16x1xf32>
    %3 = vector.extract_strided_slice %0 {offsets = [0, 16], sizes = [16, 16], strides = [1, 1]} : vector<16x48xf32> to vector<16x16xf32>
    %4 = vector.extract_strided_slice %0 {offsets = [0, 32], sizes = [16, 16], strides = [1, 1]} : vector<16x48xf32> to vector<16x16xf32>
    %c0_1 = arith.constant 0 : index
    %c0_2 = arith.constant 0 : index
    %5 = vector.load %arg0[%c0_1, %c0_2] : memref<1x256xf32, #tpu.memory_space<vmem>>, vector<1x256xf32>
    %6 = vector.shape_cast %5 : vector<1x256xf32> to vector<1x256xf32>
    %7 = vector.broadcast %6 : vector<1x256xf32> to vector<8x256xf32>
    %c0_3 = arith.constant 0 : index
    %c0_4 = arith.constant 0 : index
    %8 = vector.load %arg1[%c0_3, %c0_4] : memref<1x256xf32, #tpu.memory_space<vmem>>, vector<1x256xf32>
    %9 = vector.shape_cast %8 : vector<1x256xf32> to vector<1x256xf32>
    %10 = vector.broadcast %9 : vector<1x256xf32> to vector<8x256xf32>
    %11 = tpu.concatenate %7, %10 in 0 : vector<8x256xf32>, vector<8x256xf32> -> vector<16x256xf32>
    %12 = vector.extract_strided_slice %1 {offsets = [0, 0], sizes = [16, 1], strides = [1, 1]} : vector<16x3xf32> to vector<16x1xf32>
    %13 = vector.extract_strided_slice %11 {offsets = [0, 0], sizes = [16, 254], strides = [1, 1]} : vector<16x256xf32> to vector<16x254xf32>
    %14 = vector.broadcast %12 : vector<16x1xf32> to vector<16x254xf32>
    %15 = arith.mulf %14, %13 : vector<16x254xf32>
    %16 = vector.extract_strided_slice %1 {offsets = [0, 1], sizes = [16, 1], strides = [1, 1]} : vector<16x3xf32> to vector<16x1xf32>
    %17 = vector.extract_strided_slice %11 {offsets = [0, 1], sizes = [16, 254], strides = [1, 1]} : vector<16x256xf32> to vector<16x254xf32>
    %18 = vector.broadcast %16 : vector<16x1xf32> to vector<16x254xf32>
    %19 = arith.mulf %18, %17 : vector<16x254xf32>
    %20 = arith.addf %15, %19 : vector<16x254xf32>
    %21 = vector.extract_strided_slice %1 {offsets = [0, 2], sizes = [16, 1], strides = [1, 1]} : vector<16x3xf32> to vector<16x1xf32>
    %22 = vector.extract_strided_slice %11 {offsets = [0, 2], sizes = [16, 254], strides = [1, 1]} : vector<16x256xf32> to vector<16x254xf32>
    %23 = vector.broadcast %21 : vector<16x1xf32> to vector<16x254xf32>
    %24 = arith.mulf %23, %22 : vector<16x254xf32>
    %25 = arith.addf %20, %24 : vector<16x254xf32>
    %26 = vector.broadcast %2 : vector<16x1xf32> to vector<16x254xf32>
    %27 = arith.addf %25, %26 : vector<16x254xf32>
    %cst = arith.constant 0.000000e+00 : f32
    %28 = vector.broadcast %cst : f32 to vector<16x254xf32>
    %29 = arith.maximumf %27, %28 : vector<16x254xf32>
    %cst_5 = arith.constant dense<0xFF800000> : vector<16xf32>
    %30 = vector.multi_reduction <maximumf>, %29, %cst_5 [1] : vector<16x254xf32> to vector<16xf32>
    %31 = vector.shape_cast %30 : vector<16xf32> to vector<16x1xf32>
    %32 = vector.broadcast %31 : vector<16x1xf32> to vector<16x16xf32>
    %33 = arith.mulf %32, %3 : vector<16x16xf32>
    %34 = vector.extract_strided_slice %33 {offsets = [0, 0], sizes = [8, 16], strides = [1, 1]} : vector<16x16xf32> to vector<8x16xf32>
    %cst_6 = arith.constant dense<0.000000e+00> : vector<16xf32>
    %35 = vector.multi_reduction <add>, %34, %cst_6 [0] : vector<8x16xf32> to vector<16xf32>
    %36 = vector.shape_cast %35 : vector<16xf32> to vector<1x16xf32>
    %37 = vector.extract_strided_slice %4 {offsets = [0, 0], sizes = [1, 16], strides = [1, 1]} : vector<16x16xf32> to vector<1x16xf32>
    %38 = arith.addf %36, %37 : vector<1x16xf32>
    %39 = vector.extract_strided_slice %33 {offsets = [8, 0], sizes = [8, 16], strides = [1, 1]} : vector<16x16xf32> to vector<8x16xf32>
    %cst_7 = arith.constant dense<0.000000e+00> : vector<16xf32>
    %40 = vector.multi_reduction <add>, %39, %cst_7 [0] : vector<8x16xf32> to vector<16xf32>
    %41 = vector.shape_cast %40 : vector<16xf32> to vector<1x16xf32>
    %42 = vector.extract_strided_slice %4 {offsets = [8, 0], sizes = [1, 16], strides = [1, 1]} : vector<16x16xf32> to vector<1x16xf32>
    %43 = arith.addf %41, %42 : vector<1x16xf32>
    %44 = vector.shape_cast %38 : vector<1x16xf32> to vector<1x1x16xf32>
    %c0_8 = arith.constant 0 : index
    %c0_9 = arith.constant 0 : index
    %c0_10 = arith.constant 0 : index
    %45 = vector.load %arg3[%c0_8, %c0_9, %c0_10] : memref<1x1x16xf32, #tpu.memory_space<vmem>>, vector<1x1x16xf32>
    tpu.vector_store %arg3[%c0_8, %c0_9, %c0_10], %44 {strides = array<i32>} : memref<1x1x16xf32, #tpu.memory_space<vmem>>, vector<1x1x16xf32>,
    %46 = vector.shape_cast %43 : vector<1x16xf32> to vector<1x1x16xf32>
    %c0_11 = arith.constant 0 : index
    %c0_12 = arith.constant 0 : index
    %c0_13 = arith.constant 0 : index
    %47 = vector.load %arg4[%c0_11, %c0_12, %c0_13] : memref<1x1x16xf32, #tpu.memory_space<vmem>>, vector<1x1x16xf32>
    tpu.vector_store %arg4[%c0_11, %c0_12, %c0_13], %46 {strides = array<i32>} : memref<1x1x16xf32, #tpu.memory_space<vmem>>, vector<1x1x16xf32>,
    return
  }
}

</mosaic_0001>

<llo_original>
// kernel: _deepconn_towers.1
$region0: #{_deepconn_towers.1}
  #allocation0 [shape = 'u32[]', space=smem, size = 0x4, offset = 0x4, fixed_abs, tag = 'smem constant byte address 0x4 - core index']
  #allocation1 [shape = 'u32[72,128]{1,0:T(1,128)}', space=vmem, size = 0x9000, scoped, tag = 'internal scratch']
  %s0 = inlined_call_operand.hbm [shape: f32[1,256], index: 0, kind: input, shape index: {}]
  %s1 = inlined_call_operand.hbm [shape: f32[1,256], index: 1, kind: input, shape index: {}]
  %s2 = inlined_call_operand.hbm [shape: f32[16,48], index: 2, kind: input, shape index: {}]
  %s3 = inlined_call_operand.hbm [shape: f32[1,1,16], index: 3, kind: output, shape index: {0}]
  %s4 = inlined_call_operand.hbm [shape: f32[1,1,16], index: 4, kind: output, shape index: {1}]
  %5 = xla_tuple %s3, %s4
  %s6 = sld [smem:[#allocation0]]
  $region42: #{_deepconn_towers.1} parent=0
    _
  %s8 = ssub.s32 1, %s6
  %s9 = scalar_select 0, %s8, %s6
  $region1: #{_deepconn_towers.1} parent=0
    #allocation2 [shape = 'u8[1024]{0}', space=vmem, size = 0x400, scoped, tag = 'input window, operand 0, single buffered']
    #allocation3 [shape = 's32[1]{0}', space=sflag, size = 0x4, scoped, tag = 'scoped memory for _deepconn_towers.1']
    #allocation4 [shape = 's32[1]{0}', space=sflag, size = 0x4, scoped, tag = 'scoped memory for _deepconn_towers.1']
    #allocation5 [shape = 'u8[1024]{0}', space=vmem, size = 0x400, scoped, tag = 'input window, operand 1, single buffered']
    #allocation6 [shape = 's32[1]{0}', space=sflag, size = 0x4, scoped, tag = 'scoped memory for _deepconn_towers.1']
    #allocation7 [shape = 'u8[8192]{0}', space=vmem, size = 0x2000, scoped, tag = 'input window, operand 2, single buffered']
    #allocation8 [shape = 'u8[512]{0}', space=vmem, size = 0x400, scoped, tag = 'output window, operand 0, single buffered']
    #allocation9 [shape = 'u8[512]{0}', space=vmem, size = 0x400, scoped, tag = 'output window, operand 1, single buffered']
    #allocation10 [shape = 's32[1]{0}', space=sflag, size = 0x4, scoped, tag = 'scoped memory for _deepconn_towers.1']
    %10 = vsyncpa [#allocation3], 0
    %11 = vsyncpa [#allocation6], 0
    %12 = vsyncpa [#allocation4], 0
    %13 = vsyncpa [#allocation10], 0
    // Predicated region
    $region2: #{_deepconn_towers.1} parent=1 // pred_check
      _
    $region3: #{_deepconn_towers.1} parent=1 // pred_check_branch
      %15 = sbr.rel (0) target = $region5
    $region4: #{_deepconn_towers.1} parent=1 // pred_region
      %17 = vsyncadd [#allocation3], 0
      %s19 = sshll.u32 %s0, 4
      %s20 = int_to_ptr.hbm [resolvable:$true] %s19
      %s21 = sshll.u32 [#allocation2], 4
      %s22 = int_to_ptr.vmem [resolvable:$true] %s21
      %24 = dma.hbm_to_vmem [thread:$0]  %s20, 32, %s22, [#allocation3]
    $region5: #{_deepconn_towers.1} parent=1 // pred_fallthru
      _
    // Predicated region
    $region6: #{_deepconn_towers.1} parent=1 // pred_check
      _
    $region7: #{_deepconn_towers.1} parent=1 // pred_check_branch
      %26 = sbr.rel (0) target = $region9
    $region8: #{_deepconn_towers.1} parent=1 // pred_region
      %28 = vsyncadd [#allocation6], 0
      %s30 = sshll.u32 %s1, 4
      %s31 = int_to_ptr.hbm [resolvable:$true] %s30
      %s32 = sshll.u32 [#allocation5], 4
      %s33 = int_to_ptr.vmem [resolvable:$true] %s32
      %35 = dma.hbm_to_vmem [thread:$0]  %s31, 32, %s33, [#allocation6]
    $region9: #{_deepconn_towers.1} parent=1 // pred_fallthru
      _
    // Predicated region
    $region10: #{_deepconn_towers.1} parent=1 // pred_check
      _
    $region11: #{_deepconn_towers.1} parent=1 // pred_check_branch
      %37 = sbr.rel (0) target = $region13
    $region12: #{_deepconn_towers.1} parent=1 // pred_region
      %39 = vsyncadd [#allocation6], 0
      %s40 = sshll.u32 %s2, 4
      %s41 = int_to_ptr.hbm [resolvable:$true] %s40
      %s42 = sshll.u32 [#allocation7], 4
      %s43 = int_to_ptr.vmem [resolvable:$true] %s42
      %48 = dma.hbm_to_vmem [thread:$0]  %s41, 256, %s43, [#allocation6], 128, 128, 8
    $region13: #{_deepconn_towers.1} parent=1 // pred_fallthru
      _
    // Predicated region
    $region14: #{_deepconn_towers.1} parent=1 // pred_check
      _
    $region15: #{_deepconn_towers.1} parent=1 // pred_check_branch
      %50 = sbr.rel (0) target = $region17
    $region16: #{_deepconn_towers.1} parent=1 // pred_region
      %52 = dma.done [#allocation3], 32
    $region17: #{_deepconn_towers.1} parent=1 // pred_fallthru
      _
    // Predicated region
    $region18: #{_deepconn_towers.1} parent=1 // pred_check
      _
    $region19: #{_deepconn_towers.1} parent=1 // pred_check_branch
      %54 = sbr.rel (0) target = $region21
    $region20: #{_deepconn_towers.1} parent=1 // pred_region
      %56 = dma.done [#allocation6], 32
    $region21: #{_deepconn_towers.1} parent=1 // pred_fallthru
      _
    // Predicated region
    $region22: #{_deepconn_towers.1} parent=1 // pred_check
      _
    $region23: #{_deepconn_towers.1} parent=1 // pred_check_branch
      %58 = sbr.rel (0) target = $region25
    $region24: #{_deepconn_towers.1} parent=1 // pred_region
      %60 = dma.done [#allocation6], 256
    $region25: #{_deepconn_towers.1} parent=1 // pred_fallthru
      _
    %v61 = vld [vmem:[#allocation7] sm:$0xff]
    %v62 = vld [vmem:[#allocation7 + $0x8] sm:$0xff]
    %v63 = vld [vmem:[#allocation2] sm:$0x3]
    %v65 = vperm.slane %v63, 0
    %v66 = vperm.slane %v63, 1
    %v69 = vld [vmem:[#allocation5] sm:$0x3]
    %v71 = vperm.slane %v69, 0
    %v72 = vperm.slane %v69, 1
    %76 = vset.pattern.permute.xlu0 0
    %77 = vperm.xlu0 %76, %v61
    %v78 = vpop.permute.xlu0 %77
    %81 = vset.pattern.permute.xlu0 0
    %82 = vperm.xlu0 %81, %v62
    %v83 = vpop.permute.xlu0 %82
    %v85 = vmul.f32 %v78, %v65
    %v86 = vmul.f32 %v78, %v66
    %v87 = vmul.f32 %v83, %v71
    %v88 = vmul.f32 %v83, %v72
    %89 = vset.pattern.permute.xlu0 1
    %90 = vperm.xlu0 %89, %v61
    %v91 = vpop.permute.xlu0 %90
    %93 = vset.pattern.permute.xlu0 1
    %94 = vperm.xlu0 %93, %v62
    %v95 = vpop.permute.xlu0 %94
    %v97 = vmul.f32 %v91, %v65
    %v98 = vmul.f32 %v91, %v66
    %v99 = vmul.f32 %v95, %v71
    %v100 = vmul.f32 %v95, %v72
    %105 = vrot.lane.b32.xlu0 %v97, 127
    %v106 = vpop.permute.xlu0 %105
    %107 = vrot.lane.b32.xlu0 %v98, 127
    %v108 = vpop.permute.xlu0 %107
    %109 = vrot.lane.b32.xlu0 %v99, 127
    %v110 = vpop.permute.xlu0 %109
    %111 = vrot.lane.b32.xlu0 %v100, 127
    %v112 = vpop.permute.xlu0 %111
    %vm113 = vcmask 1039360
    %v114 = vsel %vm113, %v106, %v108
    %v115 = vsel %vm113, %v110, %v112
    %v120 = vadd.f32 %v85, %v114
    %v121 = vadd.f32 %v86, %v108
    %v122 = vadd.f32 %v87, %v115
    %v123 = vadd.f32 %v88, %v112
    %124 = vset.pattern.permute.xlu0 2
    %125 = vperm.xlu0 %124, %v61
    %v126 = vpop.permute.xlu0 %125
    %128 = vset.pattern.permute.xlu0 2
    %129 = vperm.xlu0 %128, %v62
    %v130 = vpop.permute.xlu0 %129
    %v132 = vmul.f32 %v126, %v65
    %v133 = vmul.f32 %v126, %v66
    %v134 = vmul.f32 %v130, %v71
    %v135 = vmul.f32 %v130, %v72
    %140 = vrot.lane.b32.xlu0 %v132, 126
    %v141 = vpop.permute.xlu0 %140
    %142 = vrot.lane.b32.xlu0 %v133, 126
    %v143 = vpop.permute.xlu0 %142
    %144 = vrot.lane.b32.xlu0 %v134, 126
    %v145 = vpop.permute.xlu0 %144
    %146 = vrot.lane.b32.xlu0 %v135, 126
    %v147 = vpop.permute.xlu0 %146
    %vm148 = vcmask 1031168
    %v149 = vsel %vm148, %v141, %v143
    %v150 = vsel %vm148, %v145, %v147
    %v155 = vadd.f32 %v120, %v149
    %v156 = vadd.f32 %v121, %v143
    %v157 = vadd.f32 %v122, %v150
    %v158 = vadd.f32 %v123, %v147
    %159 = vset.pattern.permute.xlu0 8
    %160 = vperm.xlu0 %159, %v61
    %v161 = vpop.permute.xlu0 %160
    %163 = vset.pattern.permute.xlu0 8
    %164 = vperm.xlu0 %163, %v62
    %v165 = vpop.permute.xlu0 %164
    %v167 = vadd.f32 %v155, %v161
    %v168 = vadd.f32 %v156, %v161
    %v169 = vadd.f32 %v157, %v165
    %v170 = vadd.f32 %v158, %v165
    %v171 = vmax.f32 %v167, 0.0
    %v172 = vmax.f32 %v168, 0.0
    %v173 = vmax.f32 %v169, 0.0
    %v174 = vmax.f32 %v170, 0.0
    %v175 = vsel %vm148, %v172, -inf
    %v176 = vmax.f32 %v171, %v175
    %177 = vmax.xlane.f32.xlu0 %v176
    %v178 = vpop.xlane.xlu0 %177
    %v179 = vsel %vm148, %v174, -inf
    %v180 = vmax.f32 %v173, %v179
    %181 = vmax.xlane.f32.xlu0 %v180
    %v182 = vpop.xlane.xlu0 %181
    %v183 = vmul.f32 %v178, %v61
    %v184 = vmul.f32 %v182, %v62
    %vm185 = vcmask 261248
    %v186 = vsel %vm185, %v183, 0.0
    %v187 = vrot.slane %v186, 4
    %v188 = vadd.f32 %v186, %v187
    %v189 = vrot.slane %v188, 2
    %v190 = vadd.f32 %v188, %v189
    %v191 = vrot.slane %v190, 1
    %v192 = vadd.f32 %v190, %v191
    %193 = vrot.lane.b32.xlu0 %v61, 112
    %v194 = vpop.permute.xlu0 %193
    %v196 = vadd.f32 %v192, %v194
    %v197 = vsel %vm185, %v184, 0.0
    %v198 = vrot.slane %v197, 4
    %v199 = vadd.f32 %v197, %v198
    %v200 = vrot.slane %v199, 2
    %v201 = vadd.f32 %v199, %v200
    %v202 = vrot.slane %v201, 1
    %v203 = vadd.f32 %v201, %v202
    %204 = vrot.lane.b32.xlu0 %v62, 112
    %v205 = vpop.permute.xlu0 %204
    %v207 = vadd.f32 %v203, %v205
    %209 = vrot.lane.b32.xlu0 %v196, 112
    %v210 = vpop.permute.xlu0 %209
    %vm212 = vcmask 122880
    %213 = vst.msk [vmem:[#allocation8] sm:$0x1] %vm212, %v210
    %215 = vrot.lane.b32.xlu0 %v207, 112
    %v216 = vpop.permute.xlu0 %215
    %218 = vst.msk [vmem:[#allocation9] sm:$0x1] %vm212, %v216
    // Predicated region
    $region26: #{_deepconn_towers.1} parent=1 // pred_check
      _
    $region27: #{_deepconn_towers.1} parent=1 // pred_check_branch
      %220 = sbr.rel (0) target = $region29
    $region28: #{_deepconn_towers.1} parent=1 // pred_region
      %222 = vsyncadd [#allocation4], 0
      %s224 = sshll.u32 [#allocation8], 4
      %s225 = int_to_ptr.vmem [resolvable:$true] %s224
      %s226 = sshll.u32 %s3, 4
      %s227 = int_to_ptr.hbm [resolvable:$true] %s226
      %229 = dma.vmem_to_hbm [thread:$0]  %s225, 16, %s227, [#allocation4]
    $region29: #{_deepconn_towers.1} parent=1 // pred_fallthru
      _
    // Predicated region
    $region30: #{_deepconn_towers.1} parent=1 // pred_check
      _
    $region31: #{_deepconn_towers.1} parent=1 // pred_check_branch
      %231 = sbr.rel (0) target = $region33
    $region32: #{_deepconn_towers.1} parent=1 // pred_region
      %233 = vsyncadd [#allocation10], 0
      %s235 = sshll.u32 [#allocation9], 4
      %s236 = int_to_ptr.vmem [resolvable:$true] %s235
      %s237 = sshll.u32 %s4, 4
      %s238 = int_to_ptr.hbm [resolvable:$true] %s237
      %240 = dma.vmem_to_hbm [thread:$0]  %s236, 16, %s238, [#allocation10]
    $region33: #{_deepconn_towers.1} parent=1 // pred_fallthru
      _
    // Predicated region
    $region34: #{_deepconn_towers.1} parent=1 // pred_check
      _
    $region35: #{_deepconn_towers.1} parent=1 // pred_check_branch
      %242 = sbr.rel (0) target = $region37
    $region36: #{_deepconn_towers.1} parent=1 // pred_region
      %244 = dma.done [#allocation4], 16
    $region37: #{_deepconn_towers.1} parent=1 // pred_fallthru
      _
    // Predicated region
    $region38: #{_deepconn_towers.1} parent=1 // pred_check
      _
    $region39: #{_deepconn_towers.1} parent=1 // pred_check_branch
      %246 = sbr.rel (0) target = $region41
    $region40: #{_deepconn_towers.1} parent=1 // pred_region
      %248 = dma.done [#allocation10], 16
    $region41: #{_deepconn_towers.1} parent=1 // pred_fallthru
      _
    %249 = vsyncpa [#allocation3], 1
    %250 = vsyncpa [#allocation6], 1
    %251 = vsyncpa [#allocation4], 1
    %252 = vsyncpa [#allocation10], 1

</llo_original>
